<compile_context>
chip_gen: v6e
topology: v6e:2x2x1
jax: 0.10.0
libtpu: 0.0.40
codegen_flags: <defaults>
</compile_context>

<pallas_src>
import jax
import jax.numpy as jnp
from jax import lax
from jax.experimental import pallas as pl
from jax.experimental.pallas import tpu as pltpu

NEG_SLOPE = 0.01  # torch.nn.LeakyReLU default


def _round_up(n, m):
    return ((n + m - 1) // m) * m


def make_mlp_kernel(n_linear):
    """MLP kernel with batch-on-lanes internal layout.

    Ref order: x (bm, in_dim), (w0, b0), (w1, b1), ..., (w_diff, b_diff),
               out (bm, 2).
    Hidden wi are (out_i, in_i) (PyTorch layout), bi are (out_i, 1).
    The final Linear + 2-way softmax have been folded by the wrapper into a
    single logit-difference row (w_diff, b_diff).
    """

    def kernel(*refs):
        x_ref = refs[0]
        out_ref = refs[-1]

        # Layer 0: contract the input features (dim 1 of w0 with dim 1 of the
        # (bm, 18) x block) -> (out0, bm).  Batch lands on the lane axis, so no
        # wrapper-side transpose of x is needed; the relayout rides the
        # otherwise idle MXU/XLU slots and hides under the DMA.
        w0 = refs[1][...]                      # (out0, in_dim)
        b0 = refs[2][...]                      # (out0, 1) -> broadcast over lanes
        h = lax.dot_general(
            w0, x_ref[...],
            dimension_numbers=(((1,), (1,)), ((), ())),
            preferred_element_type=jnp.float32) + b0
        h = jnp.where(h > 0, h, NEG_SLOPE * h)  # LeakyReLU

        # Hidden layers (batch stays on lanes).
        for i in range(1, n_linear - 1):
            w = refs[1 + 2 * i][...]            # (out_i, in_i)
            b = refs[2 + 2 * i][...]            # (out_i, 1)
            h = jnp.dot(w, h, preferred_element_type=jnp.float32) + b
            h = jnp.where(h > 0, h, NEG_SLOPE * h)

        # Folded final layer: logit difference d = (W1-W0) h + (b1-b0), (1, bm).
        wd = refs[1 + 2 * (n_linear - 1)][...]  # (1, prev)
        bd = refs[2 + 2 * (n_linear - 1)][...]  # (1, 1)
        d = jnp.dot(wd, h, preferred_element_type=jnp.float32) + bd

        # 2-class softmax == sign-stable sigmoid of the logit difference:
        #   softmax([h0, h1])[1] = 1 / (1 + exp(-(h1 - h0)))
        z = jnp.exp(-jnp.abs(d))                # EUP, z in (0, 1]
        inv = 1.0 / (1.0 + z)                   # exact (keeps 1e-5 tolerance)
        p1 = jnp.where(d >= 0, inv, z * inv)    # softmax[..., 1]
        p0 = jnp.where(d >= 0, z * inv, inv)    # softmax[..., 0]

        probs = jnp.concatenate([p0, p1], axis=0)       # (2, bm), lane-dense
        out_ref[...] = probs.T.astype(out_ref.dtype)    # in-kernel (bm, 2) store

    return kernel


def color_guesser_forward(x, params, *, bm=8192):
    """x: (B, 18) float32.  params: list of (W, b), W (out, in), b (out, 1).

    Returns softmax probabilities, shape (B, 2), float32.
    """
    B, in_dim = x.shape
    n_linear = len(params)
    assert n_linear >= 2, "ColorGuesser has at least one mid layer"
    assert params[-1][0].shape[0] == 2, "final layer must have 2 outputs"

    # Fold final Linear + 2-way softmax into a single logit-difference row.
    w_last, b_last = params[-1]
    kparams = list(params[:-1]) + [
        (w_last[1:2] - w_last[0:1], b_last[1:2] - b_last[0:1])
    ]

    # Batch tile: large to amortize per-step overhead, clamped for small B,
    # kept a multiple of 128 so internal lane axes stay aligned.
    bm_eff = min(_round_up(bm, 128), _round_up(B, 128))
    # Ragged last block: Pallas pads OOB reads and masks OOB writes; garbage
    # lanes only flow through per-lane ops and the extra output rows are never
    # stored, so no jnp.pad / slicing passes over HBM are needed.
    n_blocks = pl.cdiv(B, bm_eff)

    flat_params = []
    in_specs = [pl.BlockSpec((bm_eff, in_dim), lambda i: (i, 0))]
    for w, b in kparams:
        flat_params += [w, b]
        # Constant index_map -> weights/biases stay VMEM-resident across steps.
        in_specs.append(pl.BlockSpec(w.shape, lambda i: (0, 0)))
        in_specs.append(pl.BlockSpec(b.shape, lambda i: (0, 0)))

    return pl.pallas_call(
        make_mlp_kernel(n_linear),
        out_shape=jax.ShapeDtypeStruct((B, 2), jnp.float32),
        grid=(n_blocks,),
        in_specs=in_specs,
        out_specs=pl.BlockSpec((bm_eff, 2), lambda i: (i, 0)),
        compiler_params=pltpu.CompilerParams(
            dimension_semantics=("parallel",),
            # Lane-padded (bm,18)/(bm,2) window buffers + f32 intermediates at
            # bm=8192 need ~30 MiB; 48 MiB is safe on v5e/v6e (128 MiB phys)
            # and within v7x's 64 MiB physical VMEM.
            vmem_limit_bytes=48 * 1024 * 1024),
    )(x, *flat_params)


def init_params(key, in_dim, mid_layers, out_dim):
    """PyTorch-Linear-style init; weights kept in torch (out, in) layout."""
    dims = [in_dim] + list(mid_layers) + [out_dim]
    params = []
    for i in range(len(dims) - 1):
        fan_in, fan_out = dims[i], dims[i + 1]
        key, kw, kb = jax.random.split(key, 3)
        bound = 1.0 / jnp.sqrt(jnp.float32(fan_in))
        w = jax.random.uniform(kw, (fan_out, fan_in), jnp.float32, -bound, bound)
        b = jax.random.uniform(kb, (fan_out, 1), jnp.float32, -bound, bound)
        params.append((w, b))
    return params


def reference_forward(x, params):
    h = x
    n = len(params)
    for i, (w, b) in enumerate(params):
        h = h @ w.T + b[:, 0]
        if i < n - 1:
            h = jnp.where(h > 0, h, NEG_SLOPE * h)
    return jax.nn.softmax(h, axis=-1)


if __name__ == "__main__":
    key = jax.random.PRNGKey(0)
    kx, kp = jax.random.split(key)

    in_dim = 18          # fixed by the module
    mid_layers = [32, 16]
    out_dim = 2          # fixed by the module

    params = init_params(kp, in_dim, mid_layers, out_dim)

    # Small test shapes:
    #  - batch=8 with the default (clamped) tile: single partial block.
    #  - batch=600 with bm=256: multiple grid steps + ragged last block.
    #  - batch=600 with the default tile: single block, default-path compile.
    for batch, bm in ((8, 8192), (600, 256), (600, 8192)):
        kx, kcur = jax.random.split(kx)
        x = jax.random.normal(kcur, (batch, in_dim), jnp.float32)

        out = jax.block_until_ready(color_guesser_forward(x, params, bm=bm))
        ref = reference_forward(x, params)

        assert out.shape == (batch, out_dim)
        assert jnp.allclose(out, ref, atol=1e-5, rtol=1e-5), \
            f"mismatch vs JAX reference at batch={batch}, bm={bm}"
        assert jnp.allclose(jnp.sum(out, axis=-1), 1.0, atol=1e-5), \
            "softmax rows must sum to 1"

    print("KERNEL_OK")
</pallas_src>

<mosaic_0001>
module attributes {stable_mosaic.version = 11 : i64} {
  func.func @kernel(%arg0: i32, %arg1: memref<128x18xf32, #tpu.memory_space<vmem>>, %arg2: memref<32x18xf32, #tpu.memory_space<vmem>>, %arg3: memref<32x1xf32, #tpu.memory_space<vmem>>, %arg4: memref<16x32xf32, #tpu.memory_space<vmem>>, %arg5: memref<16x1xf32, #tpu.memory_space<vmem>>, %arg6: memref<1x16xf32, #tpu.memory_space<vmem>>, %arg7: memref<1x1xf32, #tpu.memory_space<vmem>>, %arg8: memref<128x2xf32, #tpu.memory_space<vmem>>) attributes {dimension_semantics = [#tpu.dimension_semantics<parallel>], iteration_bounds = array<i64: 1>, scalar_prefetch = 0 : i64, scratch_operands = 0 : i64, tpu.core_type = #tpu.core_type<tc>, window_params = [{transform_indices = @transform_0, window_bounds = array<i64: 128, 18>}, {pipeline_mode = #tpu.pipeline_mode<synchronous>, transform_indices = @transform_1, window_bounds = array<i64: 32, 18>}, {pipeline_mode = #tpu.pipeline_mode<synchronous>, transform_indices = @transform_2, window_bounds = array<i64: 32, 1>}, {pipeline_mode = #tpu.pipeline_mode<synchronous>, transform_indices = @transform_3, window_bounds = array<i64: 16, 32>}, {pipeline_mode = #tpu.pipeline_mode<synchronous>, transform_indices = @transform_4, window_bounds = array<i64: 16, 1>}, {pipeline_mode = #tpu.pipeline_mode<synchronous>, transform_indices = @transform_5, window_bounds = array<i64: 1, 16>}, {pipeline_mode = #tpu.pipeline_mode<synchronous>, transform_indices = @transform_6, window_bounds = array<i64: 1, 1>}, {transform_indices = @transform_7, window_bounds = array<i64: 128, 2>}]} {
    %c0 = arith.constant 0 : index
    %c0_0 = arith.constant 0 : index
    %0 = vector.load %arg2[%c0, %c0_0] : memref<32x18xf32, #tpu.memory_space<vmem>>, vector<32x18xf32>
    %c0_1 = arith.constant 0 : index
    %c0_2 = arith.constant 0 : index
    %1 = vector.load %arg3[%c0_1, %c0_2] : memref<32x1xf32, #tpu.memory_space<vmem>>, vector<32x1xf32>
    %c0_3 = arith.constant 0 : index
    %c0_4 = arith.constant 0 : index
    %2 = vector.load %arg1[%c0_3, %c0_4] : memref<128x18xf32, #tpu.memory_space<vmem>>, vector<128x18xf32>
    %cst = arith.constant dense<0.000000e+00> : vector<32x128xf32>
    %3 = tpu.matmul %0, %2, %cst {dimension_numbers = #tpu.dot_dimension_numbers<[1], [1], [0], [0], [0, 0, 1, 0], [], []>} : vector<32x18xf32>, vector<128x18xf32>, vector<32x128xf32> -> vector<32x128xf32>
    %4 = vector.broadcast %1 : vector<32x1xf32> to vector<32x128xf32>
    %5 = arith.addf %3, %4 : vector<32x128xf32>
    %cst_5 = arith.constant 0.000000e+00 : f32
    %6 = vector.broadcast %cst_5 : f32 to vector<32x128xf32>
    %7 = arith.cmpf ogt, %5, %6 : vector<32x128xf32>
    %cst_6 = arith.constant 0.00999999977 : f32
    %8 = vector.broadcast %cst_6 : f32 to vector<32x128xf32>
    %9 = arith.mulf %8, %5 : vector<32x128xf32>
    %10 = arith.select %7, %5, %9 : vector<32x128xi1>, vector<32x128xf32>
    %c0_7 = arith.constant 0 : index
    %c0_8 = arith.constant 0 : index
    %11 = vector.load %arg4[%c0_7, %c0_8] : memref<16x32xf32, #tpu.memory_space<vmem>>, vector<16x32xf32>
    %c0_9 = arith.constant 0 : index
    %c0_10 = arith.constant 0 : index
    %12 = vector.load %arg5[%c0_9, %c0_10] : memref<16x1xf32, #tpu.memory_space<vmem>>, vector<16x1xf32>
    %cst_11 = arith.constant dense<0.000000e+00> : vector<16x128xf32>
    %13 = tpu.matmul %11, %10, %cst_11 {dimension_numbers = #tpu.dot_dimension_numbers<[1], [0], [0], [1], [0, 0, 1, 1], [], []>} : vector<16x32xf32>, vector<32x128xf32>, vector<16x128xf32> -> vector<16x128xf32>
    %14 = vector.broadcast %12 : vector<16x1xf32> to vector<16x128xf32>
    %15 = arith.addf %13, %14 : vector<16x128xf32>
    %cst_12 = arith.constant 0.000000e+00 : f32
    %16 = vector.broadcast %cst_12 : f32 to vector<16x128xf32>
    %17 = arith.cmpf ogt, %15, %16 : vector<16x128xf32>
    %cst_13 = arith.constant 0.00999999977 : f32
    %18 = vector.broadcast %cst_13 : f32 to vector<16x128xf32>
    %19 = arith.mulf %18, %15 : vector<16x128xf32>
    %20 = arith.select %17, %15, %19 : vector<16x128xi1>, vector<16x128xf32>
    %c0_14 = arith.constant 0 : index
    %c0_15 = arith.constant 0 : index
    %21 = vector.load %arg6[%c0_14, %c0_15] : memref<1x16xf32, #tpu.memory_space<vmem>>, vector<1x16xf32>
    %c0_16 = arith.constant 0 : index
    %c0_17 = arith.constant 0 : index
    %22 = vector.load %arg7[%c0_16, %c0_17] : memref<1x1xf32, #tpu.memory_space<vmem>>, vector<1x1xf32>
    %cst_18 = arith.constant dense<0.000000e+00> : vector<1x128xf32>
    %23 = tpu.matmul %21, %20, %cst_18 {dimension_numbers = #tpu.dot_dimension_numbers<[1], [0], [0], [1], [0, 0, 1, 1], [], []>} : vector<1x16xf32>, vector<16x128xf32>, vector<1x128xf32> -> vector<1x128xf32>
    %24 = vector.broadcast %22 : vector<1x1xf32> to vector<1x128xf32>
    %25 = arith.addf %23, %24 : vector<1x128xf32>
    %26 = math.absf %25 : vector<1x128xf32>
    %cst_19 = arith.constant 0.000000e+00 : f32
    %27 = vector.broadcast %cst_19 : f32 to vector<1x128xf32>
    %28 = arith.subf %27, %26 : vector<1x128xf32>
    %29 = math.exp %28 : vector<1x128xf32>
    %cst_20 = arith.constant 1.000000e+00 : f32
    %30 = vector.broadcast %cst_20 : f32 to vector<1x128xf32>
    %31 = arith.addf %30, %29 : vector<1x128xf32>
    %cst_21 = arith.constant 1.000000e+00 : f32
    %32 = vector.broadcast %cst_21 : f32 to vector<1x128xf32>
    %33 = arith.divf %32, %31 : vector<1x128xf32>
    %cst_22 = arith.constant 0.000000e+00 : f32
    %34 = vector.broadcast %cst_22 : f32 to vector<1x128xf32>
    %35 = arith.cmpf oge, %25, %34 : vector<1x128xf32>
    %36 = arith.mulf %29, %33 : vector<1x128xf32>
    %37 = arith.select %35, %33, %36 : vector<1x128xi1>, vector<1x128xf32>
    %cst_23 = arith.constant 0.000000e+00 : f32
    %38 = vector.broadcast %cst_23 : f32 to vector<1x128xf32>
    %39 = arith.cmpf oge, %25, %38 : vector<1x128xf32>
    %40 = arith.mulf %29, %33 : vector<1x128xf32>
    %41 = arith.select %39, %40, %33 : vector<1x128xi1>, vector<1x128xf32>
    %42 = tpu.concatenate %41, %37 in 0 : vector<1x128xf32>, vector<1x128xf32> -> vector<2x128xf32>
    %43 = tpu.transpose %42, [1, 0] : vector<2x128xf32> -> vector<128x2xf32>
    %c0_24 = arith.constant 0 : index
    %c0_25 = arith.constant 0 : index
    %44 = vector.load %arg8[%c0_24, %c0_25] : memref<128x2xf32, #tpu.memory_space<vmem>>, vector<128x2xf32>
    tpu.vector_store %arg8[%c0_24, %c0_25], %43 {strides = array<i32>} : memref<128x2xf32, #tpu.memory_space<vmem>>, vector<128x2xf32>,
    return
  }
  func.func @transform_0(%arg0: i32) -> (i32, i32) {
    %c0_i32 = arith.constant 0 : i32
    %c0_i32_0 = arith.constant 0 : i32
    return %arg0, %c0_i32 : i32, i32
  }
  func.func @transform_1(%arg0: i32) -> (i32, i32) {
    %c0_i32 = arith.constant 0 : i32
    %c0_i32_0 = arith.constant 0 : i32
    %c0_i32_1 = arith.constant 0 : i32
    return %c0_i32, %c0_i32_0 : i32, i32
  }
  func.func @transform_2(%arg0: i32) -> (i32, i32) {
    %c0_i32 = arith.constant 0 : i32
    %c0_i32_0 = arith.constant 0 : i32
    %c0_i32_1 = arith.constant 0 : i32
    return %c0_i32, %c0_i32_0 : i32, i32
  }
  func.func @transform_3(%arg0: i32) -> (i32, i32) {
    %c0_i32 = arith.constant 0 : i32
    %c0_i32_0 = arith.constant 0 : i32
    %c0_i32_1 = arith.constant 0 : i32
    return %c0_i32, %c0_i32_0 : i32, i32
  }
  func.func @transform_4(%arg0: i32) -> (i32, i32) {
    %c0_i32 = arith.constant 0 : i32
    %c0_i32_0 = arith.constant 0 : i32
    %c0_i32_1 = arith.constant 0 : i32
    return %c0_i32, %c0_i32_0 : i32, i32
  }
  func.func @transform_5(%arg0: i32) -> (i32, i32) {
    %c0_i32 = arith.constant 0 : i32
    %c0_i32_0 = arith.constant 0 : i32
    %c0_i32_1 = arith.constant 0 : i32
    return %c0_i32, %c0_i32_0 : i32, i32
  }
  func.func @transform_6(%arg0: i32) -> (i32, i32) {
    %c0_i32 = arith.constant 0 : i32
    %c0_i32_0 = arith.constant 0 : i32
    %c0_i32_1 = arith.constant 0 : i32
    return %c0_i32, %c0_i32_0 : i32, i32
  }
  func.func @transform_7(%arg0: i32) -> (i32, i32) {
    %c0_i32 = arith.constant 0 : i32
    %c0_i32_0 = arith.constant 0 : i32
    return %arg0, %c0_i32 : i32, i32
  }
}

</mosaic_0001>

<llo_original>
// kernel: tpu_custom_call.1
$region0: #{tpu_custom_call.1}
  #allocation0 [shape = 'u32[]', space=smem, size = 0x4, offset = 0x4, fixed_abs, tag = 'smem constant byte address 0x4 - core index']
  #allocation1 [shape = 'u32[144,128]{1,0:T(1,128)}', space=vmem, size = 0x12000, scoped, tag = 'internal scratch']
  #allocation2 [shape = 'f32[1,1]{1,0:T(1,128)S(1)}', space=vmem, size = 0x200, scoped, tag = 'scoped memory for tpu_custom_call.1']
  %s0 = inlined_call_operand.vmem [shape: f32[8,18], index: 0, kind: input, shape index: {}]
  %s1 = inlined_call_operand.vmem [shape: f32[32,18], index: 1, kind: input, shape index: {}]
  %s2 = inlined_call_operand.vmem [shape: f32[32,1], index: 2, kind: input, shape index: {}]
  %s3 = inlined_call_operand.vmem [shape: f32[16,32], index: 3, kind: input, shape index: {}]
  %s4 = inlined_call_operand.vmem [shape: f32[16,1], index: 4, kind: input, shape index: {}]
  %s5 = inlined_call_operand.vmem [shape: f32[1,16], index: 5, kind: input, shape index: {}]
  %s6 = inlined_call_operand.<no memory space> [shape: f32[1,1], index: 6, kind: input, shape index: {}]
  %s7 = inlined_call_operand.vmem [shape: f32[8,2], index: 7, kind: output, shape index: {}]
  %s8 = sld [smem:[#allocation0]]
  $region72: #{tpu_custom_call.1} parent=0
    _
  %s10 = ssub.s32 1, %s8
  %s11 = scalar_select 0, %s10, %s8
  %v12 = vstv %s6
  %13 = vst [vmem:[#allocation2] sm:$0x1] %v12
  $region1: #{tpu_custom_call.1} parent=0
    #allocation3 [shape = 'u8[65536]{0}', space=vmem, size = 0x10000, scoped, tag = 'output window, operand 0, single buffered']
    // Predicated region
    $region2: #{tpu_custom_call.1} parent=1 // pred_check
      _
    $region3: #{tpu_custom_call.1} parent=1 // pred_check_branch
      %15 = sbr.rel (0) target = $region5
    $region4: #{tpu_custom_call.1} parent=1 // pred_region
      _
    $region5: #{tpu_custom_call.1} parent=1 // pred_fallthru
      _
    // Predicated region
    $region6: #{tpu_custom_call.1} parent=1 // pred_check
      _
    $region7: #{tpu_custom_call.1} parent=1 // pred_check_branch
      %17 = sbr.rel (0) target = $region9
    $region8: #{tpu_custom_call.1} parent=1 // pred_region
      _
    $region9: #{tpu_custom_call.1} parent=1 // pred_fallthru
      _
    // Predicated region
    $region10: #{tpu_custom_call.1} parent=1 // pred_check
      _
    $region11: #{tpu_custom_call.1} parent=1 // pred_check_branch
      %19 = sbr.rel (0) target = $region13
    $region12: #{tpu_custom_call.1} parent=1 // pred_region
      _
    $region13: #{tpu_custom_call.1} parent=1 // pred_fallthru
      _
    // Predicated region
    $region14: #{tpu_custom_call.1} parent=1 // pred_check
      _
    $region15: #{tpu_custom_call.1} parent=1 // pred_check_branch
      %21 = sbr.rel (0) target = $region17
    $region16: #{tpu_custom_call.1} parent=1 // pred_region
      _
    $region17: #{tpu_custom_call.1} parent=1 // pred_fallthru
      _
    // Predicated region
    $region18: #{tpu_custom_call.1} parent=1 // pred_check
      _
    $region19: #{tpu_custom_call.1} parent=1 // pred_check_branch
      %23 = sbr.rel (0) target = $region21
    $region20: #{tpu_custom_call.1} parent=1 // pred_region
      _
    $region21: #{tpu_custom_call.1} parent=1 // pred_fallthru
      _
    // Predicated region
    $region22: #{tpu_custom_call.1} parent=1 // pred_check
      _
    $region23: #{tpu_custom_call.1} parent=1 // pred_check_branch
      %25 = sbr.rel (0) target = $region25
    $region24: #{tpu_custom_call.1} parent=1 // pred_region
      _
    $region25: #{tpu_custom_call.1} parent=1 // pred_fallthru
      _
    // Predicated region
    $region26: #{tpu_custom_call.1} parent=1 // pred_check
      _
    $region27: #{tpu_custom_call.1} parent=1 // pred_check_branch
      %27 = sbr.rel (0) target = $region29
    $region28: #{tpu_custom_call.1} parent=1 // pred_region
      _
    $region29: #{tpu_custom_call.1} parent=1 // pred_fallthru
      _
    %v28 = vld [vmem:[%s1] sm:$0xff]
    %v29 = vld [vmem:[%s1 + $0x8] sm:$0xff]
    %v30 = vld [vmem:[%s1 + $0x10] sm:$0xff]
    %v31 = vld [vmem:[%s1 + $0x18] sm:$0xff]
    %v32 = vld [vmem:[%s2] sm:$0xff]
    %v33 = vld [vmem:[%s2 + $0x8] sm:$0xff]
    %v34 = vld [vmem:[%s2 + $0x10] sm:$0xff]
    %v35 = vld [vmem:[%s2 + $0x18] sm:$0xff]
    %v36 = vld [vmem:[%s0] sm:$0xff]
    %v37 = vld [vmem:[%s0 + $0x8] sm:$0xff]
    %v38 = vld [vmem:[%s0 + $0x10] sm:$0xff]
    %v39 = vld [vmem:[%s0 + $0x18] sm:$0xff]
    %v40 = vld [vmem:[%s0 + $0x20] sm:$0xff]
    %v41 = vld [vmem:[%s0 + $0x28] sm:$0xff]
    %v42 = vld [vmem:[%s0 + $0x30] sm:$0xff]
    %v43 = vld [vmem:[%s0 + $0x38] sm:$0xff]
    %v44 = vld [vmem:[%s0 + $0x40] sm:$0xff]
    %v45 = vld [vmem:[%s0 + $0x48] sm:$0xff]
    %v46 = vld [vmem:[%s0 + $0x50] sm:$0xff]
    %v47 = vld [vmem:[%s0 + $0x58] sm:$0xff]
    %v48 = vld [vmem:[%s0 + $0x60] sm:$0xff]
    %v49 = vld [vmem:[%s0 + $0x68] sm:$0xff]
    %v50 = vld [vmem:[%s0 + $0x70] sm:$0xff]
    %v51 = vld [vmem:[%s0 + $0x78] sm:$0xff]
    %53 = vset.pattern.permute.xlu0 0
    %54 = vperm.xlu0 %53, %v32
    %v55 = vpop.permute.xlu0 %54
    %58 = vset.pattern.permute.xlu0 0
    %59 = vperm.xlu0 %58, %v33
    %v60 = vpop.permute.xlu0 %59
    %63 = vset.pattern.permute.xlu0 0
    %64 = vperm.xlu0 %63, %v34
    %v65 = vpop.permute.xlu0 %64
    %68 = vset.pattern.permute.xlu0 0
    %69 = vperm.xlu0 %68, %v35
    %v70 = vpop.permute.xlu0 %69
    %vm72 = vcmask 146432
    %v74 = vsel %vm72, %v28, 0
    %v77 = vsel %vm72, %v29, 0
    %v80 = vsel %vm72, %v30, 0
    %v83 = vsel %vm72, %v31, 0
    %v86 = vsel %vm72, %v36, 0
    %v89 = vsel %vm72, %v37, 0
    %v92 = vsel %vm72, %v38, 0
    %v95 = vsel %vm72, %v39, 0
    %v98 = vsel %vm72, %v40, 0
    %v101 = vsel %vm72, %v41, 0
    %v104 = vsel %vm72, %v42, 0
    %v107 = vsel %vm72, %v43, 0
    %v110 = vsel %vm72, %v44, 0
    %v113 = vsel %vm72, %v45, 0
    %v116 = vsel %vm72, %v46, 0
    %v119 = vsel %vm72, %v47, 0
    %v122 = vsel %vm72, %v48, 0
    %v125 = vsel %vm72, %v49, 0
    %v128 = vsel %vm72, %v50, 0
    %v131 = vsel %vm72, %v51, 0
    %133 = vmatprep.subr.mxu0 0.0
    %134 = vmatpush1.xpose.msra.mxu0 %v131
    %135 = vmatprep.subr.mxu0 0.0
    %136 = vmatpush1.xpose.msra.mxu0 %v128
    %137 = vmatprep.subr.mxu0 0.0
    %138 = vmatpush1.xpose.msra.mxu0 %v125
    %139 = vmatprep.subr.mxu0 0.0
    %140 = vmatpush1.xpose.msra.mxu0 %v122
    %141 = vmatprep.subr.mxu0 0.0
    %142 = vmatpush1.xpose.msra.mxu0 %v119
    %143 = vmatprep.subr.mxu0 0.0
    %144 = vmatpush1.xpose.msra.mxu0 %v116
    %145 = vmatprep.subr.mxu0 0.0
    %146 = vmatpush1.xpose.msra.mxu0 %v113
    %147 = vmatprep.subr.mxu0 0.0
    %148 = vmatpush1.xpose.msra.mxu0 %v110
    %149 = vmatprep.subr.mxu0 0.0
    %150 = vmatpush1.xpose.msra.mxu0 %v107
    %151 = vmatprep.subr.mxu0 0.0
    %152 = vmatpush1.xpose.msra.mxu0 %v104
    %153 = vmatprep.subr.mxu0 0.0
    %154 = vmatpush1.xpose.msra.mxu0 %v101
    %155 = vmatprep.subr.mxu0 0.0
    %156 = vmatpush1.xpose.msra.mxu0 %v98
    %157 = vmatprep.subr.mxu0 0.0
    %158 = vmatpush1.xpose.msra.mxu0 %v95
    %159 = vmatprep.subr.mxu0 0.0
    %160 = vmatpush1.xpose.msra.mxu0 %v92
    %161 = vmatprep.subr.mxu0 0.0
    %162 = vmatpush1.xpose.msra.mxu0 %v89
    %163 = vmatprep.subr.mxu0 0.0
    %164 = vmatpush1.xpose.msra.mxu0 %v86
    %165 = vmatprep.subr.mxu0 0.0
    %166 = vmatpush2.xpose.msra.mxu0 0.0
    %167 = vmatprep.subr.mxu0 0.0
    %168 = vmatpush2.xpose.msra.mxu0 0.0
    %169 = vmatprep.subr.mxu0 0.0
    %170 = vmatpush2.xpose.msra.mxu0 0.0
    %171 = vmatprep.subr.mxu0 0.0
    %172 = vmatpush2.xpose.msra.mxu0 0.0
    %173 = vmatprep.subr.mxu0 0.0
    %174 = vmatpush2.xpose.msra.mxu0 0.0
    %175 = vmatprep.subr.mxu0 0.0
    %176 = vmatpush2.xpose.msra.mxu0 0.0
    %177 = vmatprep.subr.mxu0 0.0
    %178 = vmatpush2.xpose.msra.mxu0 0.0
    %179 = vmatprep.subr.mxu0 0.0
    %180 = vmatpush2.xpose.msra.mxu0 0.0
    %181 = vmatprep.subr.mxu0 0.0
    %182 = vmatpush2.xpose.msra.mxu0 0.0
    %183 = vmatprep.subr.mxu0 0.0
    %184 = vmatpush2.xpose.msra.mxu0 0.0
    %185 = vmatprep.subr.mxu0 0.0
    %186 = vmatpush2.xpose.msra.mxu0 0.0
    %187 = vmatprep.subr.mxu0 0.0
    %188 = vmatpush2.xpose.msra.mxu0 0.0
    %189 = vmatprep.subr.mxu0 0.0
    %190 = vmatpush2.xpose.msra.mxu0 0.0
    %191 = vmatprep.subr.mxu0 0.0
    %192 = vmatpush2.xpose.msra.mxu0 0.0
    %193 = vmatprep.subr.mxu0 0.0
    %194 = vmatpush2.xpose.msra.mxu0 0.0
    %195 = vmatprep.subr.mxu0 0.0
    %196 = vmatpush2.xpose.msra.mxu0 0.0
    %197 = vmatprep.mubr.f32.mxu0 0.0
    %198 = vmatmul.mubr.f32.gmra.mxu0 %v74
    %v199 = vpop.f32.mrf.mxu0
    %v200 = vadd.f32 %v55, %v199
    %v201 = vpop.f32.mrf.mxu0
    %202 = vmatprep.mubr.f32.mxu0 0.0
    %203 = vmatmul.mubr.f32.gmra.mxu0 %v77
    %v204 = vpop.f32.mrf.mxu0
    %v205 = vadd.f32 %v60, %v204
    %v206 = vpop.f32.mrf.mxu0
    %207 = vmatprep.mubr.f32.mxu0 0.0
    %208 = vmatmul.mubr.f32.gmra.mxu0 %v80
    %v209 = vpop.f32.mrf.mxu0
    %v210 = vadd.f32 %v65, %v209
    %v211 = vpop.f32.mrf.mxu0
    %212 = vmatprep.mubr.f32.mxu0 0.0
    %213 = vmatmul.mubr.f32.gmra.mxu0 %v83
    %v214 = vpop.f32.mrf.mxu0
    %v215 = vadd.f32 %v70, %v214
    %v216 = vpop.f32.mrf.mxu0
    %217 = vdwg.mxu0
    %vm218 = vcmp.gt.f32.partialorder %v200, 0.0
    %vm219 = vcmp.gt.f32.partialorder %v205, 0.0
    %vm220 = vcmp.gt.f32.partialorder %v210, 0.0
    %vm221 = vcmp.gt.f32.partialorder %v215, 0.0
    %v222 = vmul.f32 %v200, 0.01
    %v223 = vmul.f32 %v205, 0.01
    %v224 = vmul.f32 %v210, 0.01
    %v225 = vmul.f32 %v215, 0.01
    %v226 = vsel %vm218, %v200, %v222
    %v227 = vsel %vm219, %v205, %v223
    %v228 = vsel %vm220, %v210, %v224
    %v229 = vsel %vm221, %v215, %v225
    %v230 = vld [vmem:[%s3] sm:$0xff]
    %v231 = vld [vmem:[%s3 + $0x8] sm:$0xff]
    %v232 = vld [vmem:[%s4] sm:$0xff]
    %v233 = vld [vmem:[%s4 + $0x8] sm:$0xff]
    %235 = vset.pattern.permute.xlu0 0
    %236 = vperm.xlu0 %235, %v232
    %v237 = vpop.permute.xlu0 %236
    %240 = vset.pattern.permute.xlu0 0
    %241 = vperm.xlu0 %240, %v233
    %v242 = vpop.permute.xlu0 %241
    %vm244 = vcmask 261120
    %v246 = vsel %vm244, %v230, 0
    %v249 = vsel %vm244, %v231, 0
    %251 = vmatprep.subr.mxu0 0.0
    %252 = vmatpush1.msra.mxu0 0.0
    %253 = vmatprep.subr.mxu0 0.0
    %254 = vmatpush1.msra.mxu0 0.0
    %255 = vmatprep.subr.mxu0 0.0
    %256 = vmatpush1.msra.mxu0 0.0
    %257 = vmatprep.subr.mxu0 0.0
    %258 = vmatpush1.msra.mxu0 0.0
    %259 = vmatprep.subr.mxu0 0.0
    %260 = vmatpush1.msra.mxu0 0.0
    %261 = vmatprep.subr.mxu0 0.0
    %262 = vmatpush1.msra.mxu0 0.0
    %263 = vmatprep.subr.mxu0 0.0
    %264 = vmatpush1.msra.mxu0 0.0
    %265 = vmatprep.subr.mxu0 0.0
    %266 = vmatpush1.msra.mxu0 0.0
    %267 = vmatprep.subr.mxu0 0.0
    %268 = vmatpush1.msra.mxu0 0.0
    %269 = vmatprep.subr.mxu0 0.0
    %270 = vmatpush1.msra.mxu0 0.0
    %271 = vmatprep.subr.mxu0 0.0
    %272 = vmatpush1.msra.mxu0 0.0
    %273 = vmatprep.subr.mxu0 0.0
    %274 = vmatpush1.msra.mxu0 0.0
    %275 = vmatprep.subr.mxu0 0.0
    %276 = vmatpush1.msra.mxu0 %v229
    %277 = vmatprep.subr.mxu0 0.0
    %278 = vmatpush1.msra.mxu0 %v228
    %279 = vmatprep.subr.mxu0 0.0
    %280 = vmatpush1.msra.mxu0 %v227
    %281 = vmatprep.subr.mxu0 0.0
    %282 = vmatpush1.msra.mxu0 %v226
    %283 = vmatprep.subr.mxu0 0.0
    %284 = vmatpush2.msra.mxu0 0.0
    %285 = vmatprep.subr.mxu0 0.0
    %286 = vmatpush2.msra.mxu0 0.0
    %287 = vmatprep.subr.mxu0 0.0
    %288 = vmatpush2.msra.mxu0 0.0
    %289 = vmatprep.subr.mxu0 0.0
    %290 = vmatpush2.msra.mxu0 0.0
    %291 = vmatprep.subr.mxu0 0.0
    %292 = vmatpush2.msra.mxu0 0.0
    %293 = vmatprep.subr.mxu0 0.0
    %294 = vmatpush2.msra.mxu0 0.0
    %295 = vmatprep.subr.mxu0 0.0
    %296 = vmatpush2.msra.mxu0 0.0
    %297 = vmatprep.subr.mxu0 0.0
    %298 = vmatpush2.msra.mxu0 0.0
    %299 = vmatprep.subr.mxu0 0.0
    %300 = vmatpush2.msra.mxu0 0.0
    %301 = vmatprep.subr.mxu0 0.0
    %302 = vmatpush2.msra.mxu0 0.0
    %303 = vmatprep.subr.mxu0 0.0
    %304 = vmatpush2.msra.mxu0 0.0
    %305 = vmatprep.subr.mxu0 0.0
    %306 = vmatpush2.msra.mxu0 0.0
    %307 = vmatprep.subr.mxu0 0.0
    %308 = vmatpush2.msra.mxu0 0.0
    %309 = vmatprep.subr.mxu0 0.0
    %310 = vmatpush2.msra.mxu0 0.0
    %311 = vmatprep.subr.mxu0 0.0
    %312 = vmatpush2.msra.mxu0 0.0
    %313 = vmatprep.subr.mxu0 0.0
    %314 = vmatpush2.msra.mxu0 0.0
    %315 = vmatprep.mubr.f32.mxu0 0.0
    %316 = vmatmul.mubr.f32.gmra.mxu0 %v246
    %v317 = vpop.f32.mrf.mxu0
    %v318 = vadd.f32 %v237, %v317
    %v319 = vpop.f32.mrf.mxu0
    %320 = vmatprep.mubr.f32.mxu0 0.0
    %321 = vmatmul.mubr.f32.gmra.mxu0 %v249
    %v322 = vpop.f32.mrf.mxu0
    %v323 = vadd.f32 %v242, %v322
    %v324 = vpop.f32.mrf.mxu0
    %325 = vdwg.mxu0
    %vm326 = vcmp.gt.f32.partialorder %v318, 0.0
    %vm327 = vcmp.gt.f32.partialorder %v323, 0.0
    %v328 = vmul.f32 %v318, 0.01
    %v329 = vmul.f32 %v323, 0.01
    %v330 = vsel %vm326, %v318, %v328
    %v331 = vsel %vm327, %v323, %v329
    %v332 = vld [vmem:[%s5] sm:$0x1]
    %v333 = vld [vmem:[#allocation2] sm:$0x1]
    %335 = vset.pattern.permute.xlu0 0
    %336 = vperm.xlu0 %335, %v333
    %v337 = vpop.permute.xlu0 %336
    %v339 = vlaneseq
    %v340 = vshrl.u32 %v339, 7
    %v341 = vsub.s32 0, %v340
    %v342 = vrot.slane %v337, %v341
    %vm343 = vcmask 130048
    %v345 = vsel %vm343, %v332, 0
    %347 = vmatprep.subr.mxu0 0.0
    %348 = vmatpush1.msra.mxu0 0.0
    %349 = vmatprep.subr.mxu0 0.0
    %350 = vmatpush1.msra.mxu0 0.0
    %351 = vmatprep.subr.mxu0 0.0
    %352 = vmatpush1.msra.mxu0 0.0
    %353 = vmatprep.subr.mxu0 0.0
    %354 = vmatpush1.msra.mxu0 0.0
    %355 = vmatprep.subr.mxu0 0.0
    %356 = vmatpush1.msra.mxu0 0.0
    %357 = vmatprep.subr.mxu0 0.0
    %358 = vmatpush1.msra.mxu0 0.0
    %359 = vmatprep.subr.mxu0 0.0
    %360 = vmatpush1.msra.mxu0 0.0
    %361 = vmatprep.subr.mxu0 0.0
    %362 = vmatpush1.msra.mxu0 0.0
    %363 = vmatprep.subr.mxu0 0.0
    %364 = vmatpush1.msra.mxu0 0.0
    %365 = vmatprep.subr.mxu0 0.0
    %366 = vmatpush1.msra.mxu0 0.0
    %367 = vmatprep.subr.mxu0 0.0
    %368 = vmatpush1.msra.mxu0 0.0
    %369 = vmatprep.subr.mxu0 0.0
    %370 = vmatpush1.msra.mxu0 0.0
    %371 = vmatprep.subr.mxu0 0.0
    %372 = vmatpush1.msra.mxu0 0.0
    %373 = vmatprep.subr.mxu0 0.0
    %374 = vmatpush1.msra.mxu0 0.0
    %375 = vmatprep.subr.mxu0 0.0
    %376 = vmatpush1.msra.mxu0 %v331
    %377 = vmatprep.subr.mxu0 0.0
    %378 = vmatpush1.msra.mxu0 %v330
    %379 = vmatprep.subr.mxu0 0.0
    %380 = vmatpush2.msra.mxu0 0.0
    %381 = vmatprep.subr.mxu0 0.0
    %382 = vmatpush2.msra.mxu0 0.0
    %383 = vmatprep.subr.mxu0 0.0
    %384 = vmatpush2.msra.mxu0 0.0
    %385 = vmatprep.subr.mxu0 0.0
    %386 = vmatpush2.msra.mxu0 0.0
    %387 = vmatprep.subr.mxu0 0.0
    %388 = vmatpush2.msra.mxu0 0.0
    %389 = vmatprep.subr.mxu0 0.0
    %390 = vmatpush2.msra.mxu0 0.0
    %391 = vmatprep.subr.mxu0 0.0
    %392 = vmatpush2.msra.mxu0 0.0
    %393 = vmatprep.subr.mxu0 0.0
    %394 = vmatpush2.msra.mxu0 0.0
    %395 = vmatprep.subr.mxu0 0.0
    %396 = vmatpush2.msra.mxu0 0.0
    %397 = vmatprep.subr.mxu0 0.0
    %398 = vmatpush2.msra.mxu0 0.0
    %399 = vmatprep.subr.mxu0 0.0
    %400 = vmatpush2.msra.mxu0 0.0
    %401 = vmatprep.subr.mxu0 0.0
    %402 = vmatpush2.msra.mxu0 0.0
    %403 = vmatprep.subr.mxu0 0.0
    %404 = vmatpush2.msra.mxu0 0.0
    %405 = vmatprep.subr.mxu0 0.0
    %406 = vmatpush2.msra.mxu0 0.0
    %407 = vmatprep.subr.mxu0 0.0
    %408 = vmatpush2.msra.mxu0 0.0
    %409 = vmatprep.subr.mxu0 0.0
    %410 = vmatpush2.msra.mxu0 0.0
    %411 = vmatprep.mubr.f32.mxu0 0.0
    %412 = vmatmul.mubr.f32.gmra.mxu0 %v345
    %v413 = vpop.f32.mrf.mxu0
    %v414 = vadd.f32 %v342, %v413
    %v415 = vpop.f32.mrf.mxu0
    %416 = vdwg.mxu0
    %v417 = vand.u32 2147483647, %v414
    %v418 = vsub.f32 0.0, %v417
    %v419 = vmul.f32 %v418, 1.442695
    %v420 = vpow.pop %v419
    %v421 = vadd.f32 %v420, 1.0
    %v422 = vrcp.pop %v421
    %v423 = vmul.f32 1.0, %v422
    %vm424 = vcmp.ge.f32.partialorder %v414, 0.0
    %v425 = vmul.f32 %v420, %v423
    %v426 = vsel %vm424, %v423, %v425
    %v427 = vsel %vm424, %v425, %v423
    %v429 = vrot.slane %v426, 7
    %vm431 = vcmask 1040384
    %v432 = vsel %vm431, %v427, %v429
    %433 = vxpose.xlu0.b32.start [1/16] %v432, 128
    %434 = vxpose.xlu0.b32.cont [2/16] 0.0, 128
    %435 = vxpose.xlu0.b32.cont [3/16] 0.0, 128
    %436 = vxpose.xlu0.b32.cont [4/16] 0.0, 128
    %437 = vxpose.xlu0.b32.cont [5/16] 0.0, 128
    %438 = vxpose.xlu0.b32.cont [6/16] 0.0, 128
    %439 = vxpose.xlu0.b32.cont [7/16] 0.0, 128
    %440 = vxpose.xlu0.b32.cont [8/16] 0.0, 128
    %441 = vxpose.xlu0.b32.cont [9/16] 0.0, 128
    %442 = vxpose.xlu0.b32.cont [10/16] 0.0, 128
    %443 = vxpose.xlu0.b32.cont [11/16] 0.0, 128
    %444 = vxpose.xlu0.b32.cont [12/16] 0.0, 128
    %445 = vxpose.xlu0.b32.cont [13/16] 0.0, 128
    %446 = vxpose.xlu0.b32.cont [14/16] 0.0, 128
    %447 = vxpose.xlu0.b32.cont [15/16] 0.0, 128
    %448 = vxpose.xlu0.b32.end [16/16] 0.0, 128
    %v449 = vpop.trf.xlu0
    %v450 = vpop.trf.xlu0
    %v451 = vpop.trf.xlu0
    %v452 = vpop.trf.xlu0
    %v453 = vpop.trf.xlu0
    %v454 = vpop.trf.xlu0
    %v455 = vpop.trf.xlu0
    %v456 = vpop.trf.xlu0
    %v457 = vpop.trf.xlu0
    %v458 = vpop.trf.xlu0
    %v459 = vpop.trf.xlu0
    %v460 = vpop.trf.xlu0
    %v461 = vpop.trf.xlu0
    %v462 = vpop.trf.xlu0
    %v463 = vpop.trf.xlu0
    %v464 = vpop.trf.xlu0
    %vm465 = vcmask 15360
    %466 = vst.msk [vmem:[#allocation3] sm:$0xff] %vm465, %v449
    %467 = vst.msk [vmem:[#allocation3 + $0x8] sm:$0xff] %vm465, %v450
    %468 = vst.msk [vmem:[#allocation3 + $0x10] sm:$0xff] %vm465, %v451
    %469 = vst.msk [vmem:[#allocation3 + $0x18] sm:$0xff] %vm465, %v452
    %470 = vst.msk [vmem:[#allocation3 + $0x20] sm:$0xff] %vm465, %v453
    %471 = vst.msk [vmem:[#allocation3 + $0x28] sm:$0xff] %vm465, %v454
    %472 = vst.msk [vmem:[#allocation3 + $0x30] sm:$0xff] %vm465, %v455
    %473 = vst.msk [vmem:[#allocation3 + $0x38] sm:$0xff] %vm465, %v456
    %474 = vst.msk [vmem:[#allocation3 + $0x40] sm:$0xff] %vm465, %v457
    %475 = vst.msk [vmem:[#allocation3 + $0x48] sm:$0xff] %vm465, %v458
    %476 = vst.msk [vmem:[#allocation3 + $0x50] sm:$0xff] %vm465, %v459
    %477 = vst.msk [vmem:[#allocation3 + $0x58] sm:$0xff] %vm465, %v460
    %478 = vst.msk [vmem:[#allocation3 + $0x60] sm:$0xff] %vm465, %v461
    %479 = vst.msk [vmem:[#allocation3 + $0x68] sm:$0xff] %vm465, %v462
    %480 = vst.msk [vmem:[#allocation3 + $0x70] sm:$0xff] %vm465, %v463
    %481 = vst.msk [vmem:[#allocation3 + $0x78] sm:$0xff] %vm465, %v464
    // Predicated region
    $region30: #{tpu_custom_call.1} parent=1 // pred_check
      _
    $region31: #{tpu_custom_call.1} parent=1 // pred_check_branch
      %483 = sbr.rel (0) target = $region33
    $region32: #{tpu_custom_call.1} parent=1 // pred_region
      // Predicated region
      $region34: #{tpu_custom_call.1} parent=32 // pred_check
        _
      $region35: #{tpu_custom_call.1} parent=32 // pred_check_branch
        %485 = sbr.rel (0) target = $region37
      $region36: #{tpu_custom_call.1} parent=32 // pred_region
        // Predicated region
        $region38: #{tpu_custom_call.1} parent=36 // pred_check
          _
        $region39: #{tpu_custom_call.1} parent=36 // pred_check_branch
          %487 = sbr.rel (0) target = $region41
        $region40: #{tpu_custom_call.1} parent=36 // pred_region
          // Predicated region
          $region53: #{tpu_custom_call.1} parent=40 // pred_check
            _
          $region54: #{tpu_custom_call.1} parent=40 // pred_check_branch
            %503 = sbr.rel (0) target = $region56
          $region55: #{tpu_custom_call.1} parent=40 // pred_region
            loop: start=0, step=1, limit=1
            $region57: #{tpu_custom_call.1} parent=55 // loop_pre_header
              _
            $region58: #{tpu_custom_call.1} parent=55 // loop_header
              %s505 = sphi 0, %s509
              %p506 = scmp.ge.s32.totalorder %s505, 1
              %s510 = sphi [#allocation3], [#allocation3]
              %s511 = sphi %s7, %s7
            $region59: #{tpu_custom_call.1} parent=55 // loop_header_branch
              %508 = sbr.rel (%p506) target = $region63
            $region60: #{tpu_custom_call.1} parent=55 // loop_body
              %v512 = vld [vmem:[%s510] sm:$0xff]
              %513 = vst [vmem:[%s511] sm:$0xff] %v512
            $region61: #{tpu_custom_call.1} parent=55 // loop_footer
              %s509 = sadd.s32 1, %s505
            $region62: #{tpu_custom_call.1} parent=55 // loop_footer_branch
              %504 = sbr.rel target = $region58
            $region63: #{tpu_custom_call.1} parent=55 // loop_exit
              _
          $region56: #{tpu_custom_call.1} parent=40 // pred_fallthru
            _
          // Predicated region
          $region64: #{tpu_custom_call.1} parent=40 // pred_check
            _
          $region65: #{tpu_custom_call.1} parent=40 // pred_check_branch
            %515 = sbr.rel target = $region67
          $region66: #{tpu_custom_call.1} parent=40 // pred_region
            _
          $region67: #{tpu_custom_call.1} parent=40 // pred_fallthru
            _
        $region41: #{tpu_custom_call.1} parent=36 // pred_fallthru
          _
        // Predicated region
        $region42: #{tpu_custom_call.1} parent=36 // pred_check
          _
        $region43: #{tpu_custom_call.1} parent=36 // pred_check_branch
          %489 = sbr.rel target = $region45
        $region44: #{tpu_custom_call.1} parent=36 // pred_region
          %s491 = ssub.s32 256, 1
          loop: start=0, step=1, limit=1
          $region46: #{tpu_custom_call.1} parent=44 // loop_pre_header
            _
          $region47: #{tpu_custom_call.1} parent=44 // loop_header
            %s493 = sphi 0, %s497
            %p494 = scmp.ge.s32.totalorder %s493, 1
            %s498 = sphi [#allocation3], [#allocation3]
            %s499 = sphi %s7, %s7
          $region48: #{tpu_custom_call.1} parent=44 // loop_header_branch
            %496 = sbr.rel (%p494) target = $region52
          $region49: #{tpu_custom_call.1} parent=44 // loop_body
            %v500 = vld [vmem:[%s498] sm:%s491]
            %501 = vst [vmem:[%s499] sm:%s491] %v500
          $region50: #{tpu_custom_call.1} parent=44 // loop_footer
            %s497 = sadd.s32 1, %s493
          $region51: #{tpu_custom_call.1} parent=44 // loop_footer_branch
            %492 = sbr.rel target = $region47
          $region52: #{tpu_custom_call.1} parent=44 // loop_exit
            _
        $region45: #{tpu_custom_call.1} parent=36 // pred_fallthru
          _
      $region37: #{tpu_custom_call.1} parent=32 // pred_fallthru
        _
      %516 = vnop
    $region33: #{tpu_custom_call.1} parent=1 // pred_fallthru
      _
    // Predicated region
    $region68: #{tpu_custom_call.1} parent=1 // pred_check
      _
    $region69: #{tpu_custom_call.1} parent=1 // pred_check_branch
      %518 = sbr.rel (0) target = $region71
    $region70: #{tpu_custom_call.1} parent=1 // pred_region
      _
    $region71: #{tpu_custom_call.1} parent=1 // pred_fallthru
      _

</llo_original>
